<compile_context>
chip_gen: v7x
topology: tpu7x:2x2x1
jax: 0.10.0
libtpu: 0.0.40
codegen_flags: <defaults>
</compile_context>

<pallas_src>
from functools import lru_cache

import numpy as np
import jax
import jax.numpy as jnp
from jax.experimental import pallas as pl
from jax.experimental.pallas import tpu as pltpu

_MIB = 1024 * 1024


# ----------------------------------------------------------------------------
# Generation-aware VMEM budgeting
# ----------------------------------------------------------------------------
@lru_cache(maxsize=1)
def _vmem_capacity_bytes():
    try:
        info = pltpu.get_tpu_info()
        cap = getattr(info, "vmem_capacity_bytes", None)
        if cap:
            return int(cap)
    except Exception:
        pass
    return 64 * _MIB  # conservative fallback (v7x-sized VMEM)


def _budgets():
    cap = _vmem_capacity_bytes()
    block_budget = min(int(cap * 0.4), 40 * _MIB)   # resident pipeline blocks
    vmem_limit = min(int(cap * 0.75), 96 * _MIB)    # scoped-VMEM limit
    return block_budget, vmem_limit


# ----------------------------------------------------------------------------
# Host-built bilinear interpolation matrices (built once, cached)
# ----------------------------------------------------------------------------
@lru_cache(maxsize=None)
def _bilinear_matrix(in_size, out_size, align_corners=True):
    """Dense interpolation matrix A (out_size, in_size): up = A @ x."""
    i = np.arange(out_size, dtype=np.float64)
    if align_corners and out_size > 1:
        src = i * (in_size - 1) / max(out_size - 1, 1)
    else:
        src = np.clip((i + 0.5) * (in_size / out_size) - 0.5, 0.0, in_size - 1)
    lo = np.clip(np.floor(src).astype(np.int64), 0, max(in_size - 2, 0))
    frac = src - lo
    A = np.zeros((out_size, in_size), np.float32)
    A[np.arange(out_size), lo] += (1.0 - frac).astype(np.float32)
    A[np.arange(out_size), np.clip(lo + 1, 0, in_size - 1)] += frac.astype(
        np.float32)
    return A


# ----------------------------------------------------------------------------
# Tile selection
# ----------------------------------------------------------------------------
def _conv_tiles(N, C, HW, block_budget):
    """(nb, thw): batch / spatial tiles for the conv stage (~2-8 MiB blocks)."""
    target = max(2 * _MIB, min(8 * _MIB, block_budget // 4))
    col_bytes = C * 4                               # one f32 HW-column of x
    if HW * col_bytes >= target:
        nb = 1
        thw = min(HW, max(128, (target // col_bytes) // 128 * 128))
    else:
        thw = HW
        nb = int(min(N, 8, max(1, target // max(HW * col_bytes, 1))))
    # Keep >= 2 grid steps so both v7x TensorCores get work.
    if pl.cdiv(N, nb) * pl.cdiv(HW, thw) < 2:
        if nb > 1:
            nb = max(1, nb // 2)
        elif thw >= 256 and thw % 256 == 0:
            thw //= 2
    return nb, thw


def _upsample_tiles(N, H, W, Ho, Wo, block_budget):
    """(t_ho, t_wo): output row / column tiles for the upsample stage."""
    bf2, f4 = 2, 4
    d_res = 2 * H * W * bf2                         # 2x d block (bf16)
    # Output-column tile (lane dim): full Wo when the awt block fits.
    if 2 * W * Wo * bf2 <= block_budget // 3:
        t_wo = Wo
    else:
        t_wo = min(Wo, max(128,
                           ((block_budget // 3) // (2 * W * bf2)) // 128 * 128))
    # Output-row tile: as many rows as the remaining budget allows, keeping the
    # per-step writeback lane-dense and >= ~1 MiB.
    per_row = 2 * t_wo * f4 + 2 * H * bf2           # 2x out rows + 2x ah rows
    remaining = max(block_budget - d_res - 2 * W * t_wo * bf2, 16 * per_row)
    rows = remaining // per_row
    if rows >= Ho or Ho <= 16:
        t_ho = Ho
    else:
        t_ho = max(16, (min(rows, Ho) // 16) * 16)  # mult of 16 (bf16 sublanes)
    # Keep >= 2 grid steps for v7x's two TensorCores.
    if N * pl.cdiv(Ho, t_ho) * pl.cdiv(Wo, t_wo) < 2 and t_ho % 32 == 0:
        t_ho //= 2
    return t_ho, t_wo


# ----------------------------------------------------------------------------
# Kernel 1 (two-stage path): fused 1x1 conv1+conv2 as (1,C)@(C,thw) projection.
# Bandwidth-bound stream over feat1 in native NCHW layout; writes bf16 d.
# ----------------------------------------------------------------------------
def _conv_kernel(bf_ref, x_ref, wf_ref, o_ref):
    # bf: SMEM (1,) f32   x: (nb, C, thw) f32   wf: (1, C) f32   o: (nb,1,thw) bf16
    for b in range(x_ref.shape[0]):                     # nb <= 8, unrolled
        d = jnp.dot(wf_ref[...], x_ref[b], preferred_element_type=jnp.float32)
        o_ref[b] = (d + bf_ref[0]).astype(o_ref.dtype)


def conv_1x1_fused(x, wf, bf):
    """x:(N,C,HW) f32, wf:(1,C) f32, bf:(1,) f32 -> (N,1,HW) bf16."""
    N, C, HW = x.shape
    block_budget, vmem_limit = _budgets()
    nb, thw = _conv_tiles(N, C, HW, block_budget)
    grid = (pl.cdiv(N, nb), pl.cdiv(HW, thw))
    return pl.pallas_call(
        _conv_kernel,
        out_shape=jax.ShapeDtypeStruct((N, 1, HW), jnp.bfloat16),
        grid=grid,
        in_specs=[
            pl.BlockSpec(memory_space=pltpu.MemorySpace.SMEM),
            pl.BlockSpec((nb, C, thw), lambda n, t: (n, 0, t)),
            pl.BlockSpec((1, C), lambda n, t: (0, 0)),
        ],
        out_specs=pl.BlockSpec((nb, 1, thw), lambda n, t: (n, 0, t)),
        compiler_params=pltpu.CompilerParams(
            dimension_semantics=("parallel", "parallel"),
            vmem_limit_bytes=vmem_limit),
    )(bf, x, wf)


# ----------------------------------------------------------------------------
# Kernel 2 (two-stage path): bilinear x4 upsample (Ah @ D @ AwT, bf16 MXU)
# + sigmoid + * max_depth, tiled over (batch, output rows, output cols).
# ----------------------------------------------------------------------------
def _upsample_kernel(md_ref, d_ref, ah_ref, awt_ref, o_ref):
    # md: SMEM (1,) f32   d:(1,H,W) bf16   ah:(t_ho,H) bf16   awt:(W,t_wo) bf16
    t = jnp.dot(ah_ref[...], d_ref[0],
                preferred_element_type=jnp.float32)              # (t_ho, W) f32
    u = jnp.dot(t.astype(jnp.bfloat16), awt_ref[...],
                preferred_element_type=jnp.float32)              # (t_ho, t_wo)
    s = pl.reciprocal(1.0 + jnp.exp(-u), approx=True)            # sigmoid on EUP
    o_ref[0] = (s * md_ref[0]).astype(o_ref.dtype)


def upsample_sigmoid_scale(d, ah, awt, md):
    """d:(N,H,W) bf16, ah:(Ho,H) bf16, awt:(W,Wo) bf16, md:(1,) -> (N,Ho,Wo) f32."""
    N, H, W = d.shape
    Ho, Wo = ah.shape[0], awt.shape[1]
    block_budget, vmem_limit = _budgets()
    t_ho, t_wo = _upsample_tiles(N, H, W, Ho, Wo, block_budget)
    grid = (N, pl.cdiv(Ho, t_ho), pl.cdiv(Wo, t_wo))
    return pl.pallas_call(
        _upsample_kernel,
        out_shape=jax.ShapeDtypeStruct((N, Ho, Wo), jnp.float32),
        grid=grid,
        in_specs=[
            pl.BlockSpec(memory_space=pltpu.MemorySpace.SMEM),
            pl.BlockSpec((1, H, W), lambda n, i, j: (n, 0, 0)),
            pl.BlockSpec((t_ho, H), lambda n, i, j: (i, 0)),
            pl.BlockSpec((W, t_wo), lambda n, i, j: (0, j)),
        ],
        out_specs=pl.BlockSpec((1, t_ho, t_wo), lambda n, i, j: (n, i, j)),
        compiler_params=pltpu.CompilerParams(
            dimension_semantics=("parallel", "parallel", "parallel"),
            vmem_limit_bytes=vmem_limit),
    )(md, d, ah, awt)


# ----------------------------------------------------------------------------
# Fused single-kernel path (small per-batch slabs): conv + upsample + sigmoid
# in one body, grid over batch only.  No `d` HBM round trip, one launch.
# ----------------------------------------------------------------------------
def _fused_kernel(bf_ref, md_ref, x2_ref, m_ref, ah_ref, awt_ref, o_ref):
    # x2:(1,C*H,W) f32   m:(H,C*H) f32   ah:(Ho,H) bf16   awt:(W,Wo) bf16
    d = jnp.dot(m_ref[...], x2_ref[0],
                preferred_element_type=jnp.float32) + bf_ref[0]       # (H, W)
    t = jnp.dot(ah_ref[...], d.astype(jnp.bfloat16),
                preferred_element_type=jnp.float32)                   # (Ho, W)
    u = jnp.dot(t.astype(jnp.bfloat16), awt_ref[...],
                preferred_element_type=jnp.float32)                   # (Ho, Wo)
    s = pl.reciprocal(1.0 + jnp.exp(-u), approx=True)
    o_ref[0] = (s * md_ref[0]).astype(o_ref.dtype)


def fused_head(x2, m, ah, awt, bf, md, Ho, Wo):
    N, CH, W = x2.shape
    H = m.shape[0]
    _, vmem_limit = _budgets()
    return pl.pallas_call(
        _fused_kernel,
        out_shape=jax.ShapeDtypeStruct((N, Ho, Wo), jnp.float32),
        grid=(N,),
        in_specs=[
            pl.BlockSpec(memory_space=pltpu.MemorySpace.SMEM),
            pl.BlockSpec(memory_space=pltpu.MemorySpace.SMEM),
            pl.BlockSpec((1, CH, W), lambda n: (n, 0, 0)),
            pl.BlockSpec((H, CH), lambda n: (0, 0)),
            pl.BlockSpec((Ho, H), lambda n: (0, 0)),
            pl.BlockSpec((W, Wo), lambda n: (0, 0)),
        ],
        out_specs=pl.BlockSpec((1, Ho, Wo), lambda n: (n, 0, 0)),
        compiler_params=pltpu.CompilerParams(
            dimension_semantics=("parallel",),
            vmem_limit_bytes=vmem_limit),
    )(bf, md, x2, m, ah, awt)


def _use_fused_path(N, C, H, W, Ho, Wo, block_budget):
    f4, bf2 = 4, 2
    x_blk = C * H * W * f4
    m_blk = H * C * H * f4          # fat conv weight costs H x extra MXU work;
    resident = 2 * (x_blk + m_blk + Ho * H * bf2 + W * Wo * bf2 + Ho * Wo * f4)
    temps = (H * W + Ho * W + 2 * Ho * Wo) * f4
    return (H <= 128 and x_blk <= 2 * _MIB
            and resident + temps <= min(block_budget, 20 * _MIB))


# ----------------------------------------------------------------------------
# Full forward
# ----------------------------------------------------------------------------
def sample_head_forward(feats, params, max_depth, ratio=4, align_corners=True,
                        force_two_stage=False):
    # feats = (process_feat4, feat4, feat3, feat2, feat1); only feat1 is used.
    feat1 = feats[-1]                              # (N, C, H, W), NCHW
    N, C, H, W = feat1.shape
    w1, b1, w2, b2 = params                        # (C,Hd), (1,Hd), (1,Hd), (1,1)

    # Exact algebraic fusion of the two 1x1 convs (no nonlinearity between).
    wf = (w1 @ w2.T).reshape(1, C).astype(jnp.float32)           # (1, C)
    bf = (b1 @ w2.T + b2).reshape(1).astype(jnp.float32)         # (1,) scalar
    md = jnp.asarray([max_depth], jnp.float32)                   # SMEM scalar

    Ho, Wo = H * ratio, W * ratio
    ah = jnp.asarray(_bilinear_matrix(H, Ho, align_corners), jnp.bfloat16)
    awt = jnp.asarray(_bilinear_matrix(W, Wo, align_corners).T, jnp.bfloat16)

    block_budget, _ = _budgets()
    if not force_two_stage and _use_fused_path(N, C, H, W, Ho, Wo, block_budget):
        # Single kernel: conv (block-sparse fat weight) + upsample + sigmoid.
        x2 = feat1.reshape(N, C * H, W)            # free contiguous view
        m = (jnp.eye(H, dtype=jnp.float32)[:, None, :]
             * wf.reshape(1, C, 1)).reshape(H, C * H)   # M[h, c*H+h] = wf[c]
        out = fused_head(x2, m, ah, awt, bf, md, Ho, Wo)
    else:
        x = feat1.reshape(N, C, H * W)             # free contiguous view
        d = conv_1x1_fused(x, wf, bf)              # (N, 1, HW) bf16
        d = d.reshape(N, H, W)
        out = upsample_sigmoid_scale(d, ah, awt, md)
    return out.reshape(N, 1, Ho, Wo)               # NCHW, matching PyTorch


if __name__ == "__main__":
    key = jax.random.PRNGKey(0)
    k_x, k_w1, k_b1, k_w2, k_b2 = jax.random.split(key, 5)

    N, C, H, W = 2, 32, 16, 16
    Hd = C // 4
    max_depth = 10.0

    feat1 = jax.random.normal(k_x, (N, C, H, W), jnp.float32)
    feats = (None, None, None, None, feat1)        # only feat1 participates

    w1 = jax.random.normal(k_w1, (C, Hd), jnp.float32) * 0.05
    b1 = jax.random.normal(k_b1, (1, Hd), jnp.float32) * 0.05
    w2 = jax.random.normal(k_w2, (1, Hd), jnp.float32) * 0.05
    b2 = jax.random.normal(k_b2, (1, 1), jnp.float32) * 0.05
    params = (w1, b1, w2, b2)

    # Pure-JAX f32 reference following the original (unfused) module math.
    x_ref = jnp.transpose(feat1, (0, 2, 3, 1)).reshape(N * H * W, C)
    d_ref = ((x_ref @ w1 + b1) @ w2.T + b2).reshape(N, H, W)
    ah_f32 = jnp.asarray(_bilinear_matrix(H, 4 * H, True))
    aw_f32 = jnp.asarray(_bilinear_matrix(W, 4 * W, True))
    ref = jax.nn.sigmoid(
        jnp.einsum("oh,nhw,pw->nop", ah_f32, d_ref, aw_f32)) * max_depth
    ref = ref.reshape(N, 1, 4 * H, 4 * W)

    # Fused single-kernel path (auto-selected at these small shapes).
    out = jax.block_until_ready(sample_head_forward(feats, params, max_depth))
    assert out.shape == (N, 1, 4 * H, 4 * W), out.shape
    err = float(jnp.max(jnp.abs(out - ref)))
    assert jnp.allclose(out, ref, atol=3e-2, rtol=1e-2), err

    # Two-stage (conv + upsample) path, used for large feature maps.
    out2 = jax.block_until_ready(
        sample_head_forward(feats, params, max_depth, force_two_stage=True))
    err2 = float(jnp.max(jnp.abs(out2 - ref)))
    assert jnp.allclose(out2, ref, atol=3e-2, rtol=1e-2), err2

    print("KERNEL_OK")
</pallas_src>

<mosaic_0001>
module attributes {stable_mosaic.version = 11 : i64} {
  func.func @_fused_kernel(%arg0: i32, %arg1: memref<1xf32, #tpu.memory_space<smem>>, %arg2: memref<1xf32, #tpu.memory_space<smem>>, %arg3: memref<1x512x16xf32, #tpu.memory_space<vmem>>, %arg4: memref<16x512xf32, #tpu.memory_space<vmem>>, %arg5: memref<64x16xbf16, #tpu.memory_space<vmem>>, %arg6: memref<16x64xbf16, #tpu.memory_space<vmem>>, %arg7: memref<1x64x64xf32, #tpu.memory_space<vmem>>) attributes {dimension_semantics = [#tpu.dimension_semantics<parallel>], iteration_bounds = array<i64: 2>, scalar_prefetch = 0 : i64, scratch_operands = 0 : i64, tpu.core_type = #tpu.core_type<tc>, window_params = [{transform_indices = @transform_0, window_bounds = array<i64: 1>}, {transform_indices = @transform_1, window_bounds = array<i64: 1>}, {transform_indices = @transform_2, window_bounds = array<i64: 1, 512, 16>}, {pipeline_mode = #tpu.pipeline_mode<synchronous>, transform_indices = @transform_3, window_bounds = array<i64: 16, 512>}, {pipeline_mode = #tpu.pipeline_mode<synchronous>, transform_indices = @transform_4, window_bounds = array<i64: 64, 16>}, {pipeline_mode = #tpu.pipeline_mode<synchronous>, transform_indices = @transform_5, window_bounds = array<i64: 16, 64>}, {transform_indices = @transform_6, window_bounds = array<i64: 1, 64, 64>}]} {
    %c0 = arith.constant 0 : index
    %c0_0 = arith.constant 0 : index
    %0 = vector.load %arg4[%c0, %c0_0] : memref<16x512xf32, #tpu.memory_space<vmem>>, vector<16x512xf32>
    %c0_1 = arith.constant 0 : index
    %c0_2 = arith.constant 0 : index
    %c0_3 = arith.constant 0 : index
    %1 = vector.load %arg3[%c0_1, %c0_2, %c0_3] : memref<1x512x16xf32, #tpu.memory_space<vmem>>, vector<1x512x16xf32>
    %2 = vector.shape_cast %1 : vector<1x512x16xf32> to vector<512x16xf32>
    %cst = arith.constant dense<0.000000e+00> : vector<16x16xf32>
    %3 = tpu.matmul %0, %2, %cst {dimension_numbers = #tpu.dot_dimension_numbers<[1], [0], [0], [1], [0, 0, 1, 1], [], []>} : vector<16x512xf32>, vector<512x16xf32>, vector<16x16xf32> -> vector<16x16xf32>
    %c0_4 = arith.constant 0 : index
    %4 = memref.load %arg1[%c0_4] : memref<1xf32, #tpu.memory_space<smem>>
    %5 = vector.broadcast %4 : f32 to vector<16x16xf32>
    %6 = arith.addf %3, %5 : vector<16x16xf32>
    %c0_5 = arith.constant 0 : index
    %c0_6 = arith.constant 0 : index
    %7 = vector.load %arg5[%c0_5, %c0_6] : memref<64x16xbf16, #tpu.memory_space<vmem>>, vector<64x16xbf16>
    %8 = arith.truncf %6 : vector<16x16xf32> to vector<16x16xbf16>
    %cst_7 = arith.constant dense<0.000000e+00> : vector<64x16xf32>
    %9 = tpu.matmul %7, %8, %cst_7 {dimension_numbers = #tpu.dot_dimension_numbers<[1], [0], [0], [1], [0, 0, 1, 1], [], []>} : vector<64x16xbf16>, vector<16x16xbf16>, vector<64x16xf32> -> vector<64x16xf32>
    %10 = arith.truncf %9 : vector<64x16xf32> to vector<64x16xbf16>
    %c0_8 = arith.constant 0 : index
    %c0_9 = arith.constant 0 : index
    %11 = vector.load %arg6[%c0_8, %c0_9] : memref<16x64xbf16, #tpu.memory_space<vmem>>, vector<16x64xbf16>
    %cst_10 = arith.constant dense<0.000000e+00> : vector<64x64xf32>
    %12 = tpu.matmul %10, %11, %cst_10 {dimension_numbers = #tpu.dot_dimension_numbers<[1], [0], [0], [1], [0, 0, 1, 1], [], []>} : vector<64x16xbf16>, vector<16x64xbf16>, vector<64x64xf32> -> vector<64x64xf32>
    %cst_11 = arith.constant 0.000000e+00 : f32
    %13 = vector.broadcast %cst_11 : f32 to vector<64x64xf32>
    %14 = arith.subf %13, %12 : vector<64x64xf32>
    %15 = math.exp %14 : vector<64x64xf32>
    %cst_12 = arith.constant 1.000000e+00 : f32
    %16 = vector.broadcast %cst_12 : f32 to vector<64x64xf32>
    %17 = arith.addf %16, %15 : vector<64x64xf32>
    %18 = tpu.reciprocal %17 {approx = true} : vector<64x64xf32> -> vector<64x64xf32>
    %c0_13 = arith.constant 0 : index
    %19 = memref.load %arg2[%c0_13] : memref<1xf32, #tpu.memory_space<smem>>
    %20 = vector.broadcast %19 : f32 to vector<64x64xf32>
    %21 = arith.mulf %18, %20 : vector<64x64xf32>
    %c0_14 = arith.constant 0 : index
    %c0_15 = arith.constant 0 : index
    %c0_16 = arith.constant 0 : index
    %22 = vector.load %arg7[%c0_14, %c0_15, %c0_16] : memref<1x64x64xf32, #tpu.memory_space<vmem>>, vector<1x64x64xf32>
    %23 = vector.shape_cast %22 : vector<1x64x64xf32> to vector<64x64xf32>
    %24 = vector.shape_cast %21 : vector<64x64xf32> to vector<1x64x64xf32>
    tpu.vector_store %arg7[%c0_14, %c0_15, %c0_16], %24 {strides = array<i32>} : memref<1x64x64xf32, #tpu.memory_space<vmem>>, vector<1x64x64xf32>,
    return
  }
  func.func @transform_0(%arg0: i32) -> i32 {
    %c0_i32 = arith.constant 0 : i32
    %c0_i32_0 = arith.constant 0 : i32
    return %c0_i32 : i32
  }
  func.func @transform_1(%arg0: i32) -> i32 {
    %c0_i32 = arith.constant 0 : i32
    %c0_i32_0 = arith.constant 0 : i32
    return %c0_i32 : i32
  }
  func.func @transform_2(%arg0: i32) -> (i32, i32, i32) {
    %c0_i32 = arith.constant 0 : i32
    %c0_i32_0 = arith.constant 0 : i32
    %c0_i32_1 = arith.constant 0 : i32
    return %arg0, %c0_i32, %c0_i32_0 : i32, i32, i32
  }
  func.func @transform_3(%arg0: i32) -> (i32, i32) {
    %c0_i32 = arith.constant 0 : i32
    %c0_i32_0 = arith.constant 0 : i32
    %c0_i32_1 = arith.constant 0 : i32
    return %c0_i32, %c0_i32_0 : i32, i32
  }
  func.func @transform_4(%arg0: i32) -> (i32, i32) {
    %c0_i32 = arith.constant 0 : i32
    %c0_i32_0 = arith.constant 0 : i32
    %c0_i32_1 = arith.constant 0 : i32
    return %c0_i32, %c0_i32_0 : i32, i32
  }
  func.func @transform_5(%arg0: i32) -> (i32, i32) {
    %c0_i32 = arith.constant 0 : i32
    %c0_i32_0 = arith.constant 0 : i32
    %c0_i32_1 = arith.constant 0 : i32
    return %c0_i32, %c0_i32_0 : i32, i32
  }
  func.func @transform_6(%arg0: i32) -> (i32, i32, i32) {
    %c0_i32 = arith.constant 0 : i32
    %c0_i32_0 = arith.constant 0 : i32
    %c0_i32_1 = arith.constant 0 : i32
    return %arg0, %c0_i32, %c0_i32_0 : i32, i32, i32
  }
}

</mosaic_0001>

<llo_original>
// kernel: tpu_custom_call.1
$region0: #{tpu_custom_call.1}
  #allocation0 [shape = 'u32[]', space=smem, size = 0x4, offset = 0x4, fixed_abs, tag = 'smem constant byte address 0x4 - core index']
  #allocation1 [shape = 'u32[144,128]{1,0:T(1,128)}', space=vmem, size = 0x12000, scoped, tag = 'internal scratch']
  #allocation2 [shape = 'f32[1]{0:T(128)S(6)}', space=smem, size = 0x200, scoped, tag = 'scoped memory for tpu_custom_call.1']
  #allocation3 [shape = 'f32[1]{0:T(128)S(6)}', space=smem, size = 0x200, scoped, tag = 'scoped memory for tpu_custom_call.1']
  %s0 = inlined_call_operand.<no memory space> [shape: f32[1], index: 0, kind: input, shape index: {}]
  %s1 = inlined_call_operand.<no memory space> [shape: f32[1], index: 1, kind: input, shape index: {}]
  %s2 = inlined_call_operand.vmem [shape: f32[2,512,16], index: 2, kind: input, shape index: {}]
  %s3 = inlined_call_operand.vmem [shape: f32[16,512], index: 3, kind: input, shape index: {}]
  %s4 = inlined_call_operand.vmem [shape: bf16[64,16], index: 4, kind: input, shape index: {}]
  %s5 = inlined_call_operand.vmem [shape: bf16[16,64], index: 5, kind: input, shape index: {}]
  %s6 = inlined_call_operand.hbm [shape: f32[2,64,64], index: 6, kind: output, shape index: {}]
  %s7 = sld [smem:[#allocation0]]
  $region57: #{tpu_custom_call.1} parent=0
    _
  %s9 = ssub.s32 1, %s7
  %s10 = scalar_select 0, %s9, %s7
  %11 = sst [smem:[#allocation2]] %s0
  %12 = sst [smem:[#allocation3]] %s1
  $region1: #{tpu_custom_call.1} parent=0
    #allocation4 [shape = 'u8[65536]{0}', space=vmem, size = 0x10000, scoped, tag = 'output window, operand 0']
    #allocation5 [shape = 's32[2]{0}', space=sflag, size = 0x8, scoped, tag = 'scoped memory for tpu_custom_call.1']
    %13 = vsyncpa [#allocation5], 0
    %s14 = scalar_lea.sflag [#allocation5], 1
    %15 = vsyncpa %s14, 0
    loop: start=0, step=1, limit=4
    $region2: #{tpu_custom_call.1} parent=1 // loop_pre_header
      _
    $region3: #{tpu_custom_call.1} parent=1 // loop_header
      %s17 = sphi 0, %s21
      %p18 = scmp.ge.s32.totalorder %s17, 4
      %s25 = sphi 0, %s25
      %s27 = sphi 0, %s25
      %s28 = sphi 0, %s27
      %s42 = sphi 0, %s28
      %s46 = sphi 0, %s46
      %s48 = sphi 0, %s46
      %s49 = sphi 0, %s48
      %s63 = sphi 0, %s49
      %s69 = sphi 0, %s71
      %s72 = sphi 0, %s69
      %s73 = sphi 0, %s72
      %s89 = sphi 0, %s73
      %s93 = sphi 0, %s93
      %s95 = sphi 0, %s93
      %s96 = sphi 0, %s95
      %s110 = sphi 0, %s96
      %s114 = sphi 0, %s114
      %s116 = sphi 0, %s114
      %s117 = sphi 0, %s116
      %s131 = sphi 0, %s117
      %s135 = sphi 0, %s135
      %s137 = sphi 0, %s135
      %s138 = sphi 0, %s137
      %s152 = sphi 0, %s138
      %s158 = sphi 0, %s160
      %s161 = sphi 0, %s158
      %s162 = sphi 0, %s161
      %s178 = sphi 0, %s162
    $region4: #{tpu_custom_call.1} parent=1 // loop_header_branch
      %20 = sbr.rel (%p18) target = $region8
    $region5: #{tpu_custom_call.1} parent=1 // loop_body
      %s22 = ssub.s32 %s17, 1
      %s23 = ssub.s32 %s17, 2
      %s24 = sadd.s32 %s17, 1
      %s26 = sadd.s32 %s25, 1
      %p29 = scmp.eq.s32.totalorder %s17, 1
      %p30 = scmp.ne.s32.totalorder %s25, %s27
      %p31 = scmp.eq.s32.totalorder %s17, 0
      %p32 = por %p30, %p31
      %p33 = scmp.ne.s32.totalorder %s25, %s27
      %p34 = scmp.eq.s32.totalorder %s22, 1
      %p35 = por %p33, %p34
      %p36 = scmp.ne.s32.totalorder %s27, %s28
      %p37 = scmp.eq.s32.totalorder %s22, 0
      %p38 = por %p36, %p37
      %p39 = scmp.ne.s32.totalorder %s27, %s28
      %p40 = scmp.eq.s32.totalorder %s23, 1
      %p41 = por %p39, %p40
      %p43 = scmp.ne.s32.totalorder %s28, %s42
      %p44 = scmp.eq.s32.totalorder %s23, 0
      %p45 = por %p43, %p44
      %s47 = sadd.s32 %s46, 1
      %p50 = scmp.eq.s32.totalorder %s17, 1
      %p51 = scmp.ne.s32.totalorder %s46, %s48
      %p52 = scmp.eq.s32.totalorder %s17, 0
      %p53 = por %p51, %p52
      %p54 = scmp.ne.s32.totalorder %s46, %s48
      %p55 = scmp.eq.s32.totalorder %s22, 1
      %p56 = por %p54, %p55
      %p57 = scmp.ne.s32.totalorder %s48, %s49
      %p58 = scmp.eq.s32.totalorder %s22, 0
      %p59 = por %p57, %p58
      %p60 = scmp.ne.s32.totalorder %s48, %s49
      %p61 = scmp.eq.s32.totalorder %s23, 1
      %p62 = por %p60, %p61
      %p64 = scmp.ne.s32.totalorder %s49, %s63
      %p65 = scmp.eq.s32.totalorder %s23, 0
      %p66 = por %p64, %p65
      %s67 = ssub.s32 %s17, %s24
      %p68 = scmp.eq.s32.totalorder %s67, 0
      %s70 = sadd.s32 %s69, 1
      %s71 = scalar_select %p68, %s69, %s70
      %p74 = pneg %p68
      %p75 = scmp.eq.s32.totalorder %s17, 1
      %p76 = por %p74, %p75
      %p77 = scmp.ne.s32.totalorder %s69, %s72
      %p78 = scmp.eq.s32.totalorder %s17, 0
      %p79 = por %p77, %p78
      %p80 = scmp.ne.s32.totalorder %s69, %s72
      %p81 = scmp.eq.s32.totalorder %s22, 1
      %p82 = por %p80, %p81
      %p83 = scmp.ne.s32.totalorder %s72, %s73
      %p84 = scmp.eq.s32.totalorder %s22, 0
      %p85 = por %p83, %p84
      %p86 = scmp.ne.s32.totalorder %s72, %s73
      %p87 = scmp.eq.s32.totalorder %s23, 1
      %p88 = por %p86, %p87
      %p90 = scmp.ne.s32.totalorder %s73, %s89
      %p91 = scmp.eq.s32.totalorder %s23, 0
      %p92 = por %p90, %p91
      %s94 = sadd.s32 %s93, 1
      %p97 = scmp.eq.s32.totalorder %s17, 1
      %p98 = scmp.ne.s32.totalorder %s93, %s95
      %p99 = scmp.eq.s32.totalorder %s17, 0
      %p100 = por %p98, %p99
      %p101 = scmp.ne.s32.totalorder %s93, %s95
      %p102 = scmp.eq.s32.totalorder %s22, 1
      %p103 = por %p101, %p102
      %p104 = scmp.ne.s32.totalorder %s95, %s96
      %p105 = scmp.eq.s32.totalorder %s22, 0
      %p106 = por %p104, %p105
      %p107 = scmp.ne.s32.totalorder %s95, %s96
      %p108 = scmp.eq.s32.totalorder %s23, 1
      %p109 = por %p107, %p108
      %p111 = scmp.ne.s32.totalorder %s96, %s110
      %p112 = scmp.eq.s32.totalorder %s23, 0
      %p113 = por %p111, %p112
      %s115 = sadd.s32 %s114, 1
      %p118 = scmp.eq.s32.totalorder %s17, 1
      %p119 = scmp.ne.s32.totalorder %s114, %s116
      %p120 = scmp.eq.s32.totalorder %s17, 0
      %p121 = por %p119, %p120
      %p122 = scmp.ne.s32.totalorder %s114, %s116
      %p123 = scmp.eq.s32.totalorder %s22, 1
      %p124 = por %p122, %p123
      %p125 = scmp.ne.s32.totalorder %s116, %s117
      %p126 = scmp.eq.s32.totalorder %s22, 0
      %p127 = por %p125, %p126
      %p128 = scmp.ne.s32.totalorder %s116, %s117
      %p129 = scmp.eq.s32.totalorder %s23, 1
      %p130 = por %p128, %p129
      %p132 = scmp.ne.s32.totalorder %s117, %s131
      %p133 = scmp.eq.s32.totalorder %s23, 0
      %p134 = por %p132, %p133
      %s136 = sadd.s32 %s135, 1
      %p139 = scmp.eq.s32.totalorder %s17, 1
      %p140 = scmp.ne.s32.totalorder %s135, %s137
      %p141 = scmp.eq.s32.totalorder %s17, 0
      %p142 = por %p140, %p141
      %p143 = scmp.ne.s32.totalorder %s135, %s137
      %p144 = scmp.eq.s32.totalorder %s22, 1
      %p145 = por %p143, %p144
      %p146 = scmp.ne.s32.totalorder %s137, %s138
      %p147 = scmp.eq.s32.totalorder %s22, 0
      %p148 = por %p146, %p147
      %p149 = scmp.ne.s32.totalorder %s137, %s138
      %p150 = scmp.eq.s32.totalorder %s23, 1
      %p151 = por %p149, %p150
      %p153 = scmp.ne.s32.totalorder %s138, %s152
      %p154 = scmp.eq.s32.totalorder %s23, 0
      %p155 = por %p153, %p154
      %s156 = ssub.s32 %s17, %s24
      %p157 = scmp.eq.s32.totalorder %s156, 0
      %s159 = sadd.s32 %s158, 1
      %s160 = scalar_select %p157, %s158, %s159
      %p163 = pneg %p157
      %p164 = scmp.eq.s32.totalorder %s17, 1
      %p165 = por %p163, %p164
      %p166 = scmp.ne.s32.totalorder %s158, %s161
      %p167 = scmp.eq.s32.totalorder %s17, 0
      %p168 = por %p166, %p167
      %p169 = scmp.ne.s32.totalorder %s158, %s161
      %p170 = scmp.eq.s32.totalorder %s22, 1
      %p171 = por %p169, %p170
      %p172 = scmp.ne.s32.totalorder %s161, %s162
      %p173 = scmp.eq.s32.totalorder %s22, 0
      %p174 = por %p172, %p173
      %p175 = scmp.ne.s32.totalorder %s161, %s162
      %p176 = scmp.eq.s32.totalorder %s23, 1
      %p177 = por %p175, %p176
      %p179 = scmp.ne.s32.totalorder %s162, %s178
      %p180 = scmp.eq.s32.totalorder %s23, 0
      %p181 = por %p179, %p180
      %p182 = scmp.le.s32.totalorder 1, %s17
      %p183 = scmp.lt.s32.totalorder %s17, 3
      %p184 = pnand %p182, %p183
      %p185 = pneg %p184
      // Predicated region
      $region9: #{tpu_custom_call.1} parent=5 // pred_check
        _
      $region10: #{tpu_custom_call.1} parent=5 // pred_check_branch
        %187 = sbr.rel (%p184) target = $region12
      $region11: #{tpu_custom_call.1} parent=5 // pred_region
        %s188 = ssub.s32 %s17, 1
        // Predicated region
        $region13: #{tpu_custom_call.1} parent=11 // pred_check
          %p189 = pneg %p38
        $region14: #{tpu_custom_call.1} parent=11 // pred_check_branch
          %191 = sbr.rel (%p189) target = $region16
        $region15: #{tpu_custom_call.1} parent=11 // pred_region
          _
        $region16: #{tpu_custom_call.1} parent=11 // pred_fallthru
          _
        // Predicated region
        $region17: #{tpu_custom_call.1} parent=11 // pred_check
          %p192 = pneg %p59
        $region18: #{tpu_custom_call.1} parent=11 // pred_check_branch
          %194 = sbr.rel (%p192) target = $region20
        $region19: #{tpu_custom_call.1} parent=11 // pred_region
          _
        $region20: #{tpu_custom_call.1} parent=11 // pred_fallthru
          _
        // Predicated region
        $region21: #{tpu_custom_call.1} parent=11 // pred_check
          %p195 = pneg %p106
        $region22: #{tpu_custom_call.1} parent=11 // pred_check_branch
          %197 = sbr.rel (%p195) target = $region24
        $region23: #{tpu_custom_call.1} parent=11 // pred_region
          _
        $region24: #{tpu_custom_call.1} parent=11 // pred_fallthru
          _
        // Predicated region
        $region25: #{tpu_custom_call.1} parent=11 // pred_check
          %p198 = pneg %p127
        $region26: #{tpu_custom_call.1} parent=11 // pred_check_branch
          %200 = sbr.rel (%p198) target = $region28
        $region27: #{tpu_custom_call.1} parent=11 // pred_region
          _
        $region28: #{tpu_custom_call.1} parent=11 // pred_fallthru
          _
        // Predicated region
        $region29: #{tpu_custom_call.1} parent=11 // pred_check
          %p201 = pneg %p148
        $region30: #{tpu_custom_call.1} parent=11 // pred_check_branch
          %203 = sbr.rel (%p201) target = $region32
        $region31: #{tpu_custom_call.1} parent=11 // pred_region
          _
        $region32: #{tpu_custom_call.1} parent=11 // pred_fallthru
          _
      $region12: #{tpu_custom_call.1} parent=5 // pred_fallthru
        _
      %p204 = scmp.lt.s32.totalorder %s17, 2
      // Predicated region
      $region33: #{tpu_custom_call.1} parent=5 // pred_check
        %p205 = pneg %p204
      $region34: #{tpu_custom_call.1} parent=5 // pred_check_branch
        %207 = sbr.rel (%p205) target = $region36
      $region35: #{tpu_custom_call.1} parent=5 // pred_region
        // Predicated region
        $region37: #{tpu_custom_call.1} parent=35 // pred_check
          %p208 = pneg %p79
        $region38: #{tpu_custom_call.1} parent=35 // pred_check_branch
          %210 = sbr.rel (%p208) target = $region40
        $region39: #{tpu_custom_call.1} parent=35 // pred_region
          %p211 = scmp.lt.s32.totalorder %s17, 1
          %s212 = scalar_select %p211, %s17, 1
          %s213 = smul.addr %s212, 64
          %s214 = smul.addr %s213, 8
          %s215 = scalar_lea.vmem %s2, %s214
        $region40: #{tpu_custom_call.1} parent=35 // pred_fallthru
          _
      $region36: #{tpu_custom_call.1} parent=5 // pred_fallthru
        _
      %p216 = scmp.le.s32.totalorder 1, %s17
      %p217 = scmp.lt.s32.totalorder %s17, 3
      %p218 = pnand %p216, %p217
      %p219 = pneg %p218
      // Predicated region
      $region41: #{tpu_custom_call.1} parent=5 // pred_check
        _
      $region42: #{tpu_custom_call.1} parent=5 // pred_check_branch
        %221 = sbr.rel (%p218) target = $region44
      $region43: #{tpu_custom_call.1} parent=5 // pred_region
        %s222 = ssub.s32 %s17, 1
        %p223 = pneg %p38
        %p224 = pneg %p35
        %p225 = pneg %p59
        %p226 = pneg %p56
        %p227 = scmp.lt.s32.totalorder %s22, 1
        %s228 = scalar_select %p227, %s22, 1
        %s229 = smul.addr %s228, 64
        %s230 = smul.addr %s229, 8
        %s231 = scalar_lea.vmem %s2, %s230
        %p232 = pneg %p85
        %p233 = pneg %p82
        %p234 = pneg %p106
        %p235 = pneg %p103
        %p236 = pneg %p127
        %p237 = pneg %p124
        %p238 = pneg %p148
        %p239 = pneg %p145
        %p240 = pneg %p174
        %p241 = pneg %p171
        %s242 = sand.u32 %s161, 1
        %s243 = scalar_lea.sflag [#allocation5], %s242
        %s244 = sand.u32 %s161, 1
        %s245 = smul.addr %s244, 64
        %s246 = scalar_lea.vmem [#allocation4], %s245
        %p247 = scmp.lt.s32.totalorder %s22, 1
        %s248 = scalar_select %p247, %s22, 1
        %s249 = smul.addr %s248, 64
        %s250 = smul.addr %s249, 8
        %s251 = scalar_lea.vmem %s2, %s250
        %v253 = vld [vmem:[%s3] sm:$0xff]
        %v254 = vld [vmem:[%s3 + $0x8] sm:$0xff]
        %v255 = vld [vmem:[%s3 + $0x10] sm:$0xff]
        %v256 = vld [vmem:[%s3 + $0x18] sm:$0xff]
        %v257 = vld [vmem:[%s3 + $0x20] sm:$0xff]
        %v258 = vld [vmem:[%s3 + $0x28] sm:$0xff]
        %v259 = vld [vmem:[%s3 + $0x30] sm:$0xff]
        %v260 = vld [vmem:[%s3 + $0x38] sm:$0xff]
        %v261 = vld [vmem:[%s251] sm:$0xff]
        %v262 = vld [vmem:[%s251 + $0x8] sm:$0xff]
        %v263 = vld [vmem:[%s251 + $0x10] sm:$0xff]
        %v264 = vld [vmem:[%s251 + $0x18] sm:$0xff]
        %v265 = vld [vmem:[%s251 + $0x20] sm:$0xff]
        %v266 = vld [vmem:[%s251 + $0x28] sm:$0xff]
        %v267 = vld [vmem:[%s251 + $0x30] sm:$0xff]
        %v268 = vld [vmem:[%s251 + $0x38] sm:$0xff]
        %v269 = vld [vmem:[%s251 + $0x40] sm:$0xff]
        %v270 = vld [vmem:[%s251 + $0x48] sm:$0xff]
        %v271 = vld [vmem:[%s251 + $0x50] sm:$0xff]
        %v272 = vld [vmem:[%s251 + $0x58] sm:$0xff]
        %v273 = vld [vmem:[%s251 + $0x60] sm:$0xff]
        %v274 = vld [vmem:[%s251 + $0x68] sm:$0xff]
        %v275 = vld [vmem:[%s251 + $0x70] sm:$0xff]
        %v276 = vld [vmem:[%s251 + $0x78] sm:$0xff]
        %v277 = vld [vmem:[%s251 + $0x80] sm:$0xff]
        %v278 = vld [vmem:[%s251 + $0x88] sm:$0xff]
        %v279 = vld [vmem:[%s251 + $0x90] sm:$0xff]
        %v280 = vld [vmem:[%s251 + $0x98] sm:$0xff]
        %v281 = vld [vmem:[%s251 + $0xa0] sm:$0xff]
        %v282 = vld [vmem:[%s251 + $0xa8] sm:$0xff]
        %v283 = vld [vmem:[%s251 + $0xb0] sm:$0xff]
        %v284 = vld [vmem:[%s251 + $0xb8] sm:$0xff]
        %v285 = vld [vmem:[%s251 + $0xc0] sm:$0xff]
        %v286 = vld [vmem:[%s251 + $0xc8] sm:$0xff]
        %v287 = vld [vmem:[%s251 + $0xd0] sm:$0xff]
        %v288 = vld [vmem:[%s251 + $0xd8] sm:$0xff]
        %v289 = vld [vmem:[%s251 + $0xe0] sm:$0xff]
        %v290 = vld [vmem:[%s251 + $0xe8] sm:$0xff]
        %v291 = vld [vmem:[%s251 + $0xf0] sm:$0xff]
        %v292 = vld [vmem:[%s251 + $0xf8] sm:$0xff]
        %v293 = vld [vmem:[%s251 + $0x100] sm:$0xff]
        %v294 = vld [vmem:[%s251 + $0x108] sm:$0xff]
        %v295 = vld [vmem:[%s251 + $0x110] sm:$0xff]
        %v296 = vld [vmem:[%s251 + $0x118] sm:$0xff]
        %v297 = vld [vmem:[%s251 + $0x120] sm:$0xff]
        %v298 = vld [vmem:[%s251 + $0x128] sm:$0xff]
        %v299 = vld [vmem:[%s251 + $0x130] sm:$0xff]
        %v300 = vld [vmem:[%s251 + $0x138] sm:$0xff]
        %v301 = vld [vmem:[%s251 + $0x140] sm:$0xff]
        %v302 = vld [vmem:[%s251 + $0x148] sm:$0xff]
        %v303 = vld [vmem:[%s251 + $0x150] sm:$0xff]
        %v304 = vld [vmem:[%s251 + $0x158] sm:$0xff]
        %v305 = vld [vmem:[%s251 + $0x160] sm:$0xff]
        %v306 = vld [vmem:[%s251 + $0x168] sm:$0xff]
        %v307 = vld [vmem:[%s251 + $0x170] sm:$0xff]
        %v308 = vld [vmem:[%s251 + $0x178] sm:$0xff]
        %v309 = vld [vmem:[%s251 + $0x180] sm:$0xff]
        %v310 = vld [vmem:[%s251 + $0x188] sm:$0xff]
        %v311 = vld [vmem:[%s251 + $0x190] sm:$0xff]
        %v312 = vld [vmem:[%s251 + $0x198] sm:$0xff]
        %v313 = vld [vmem:[%s251 + $0x1a0] sm:$0xff]
        %v314 = vld [vmem:[%s251 + $0x1a8] sm:$0xff]
        %v315 = vld [vmem:[%s251 + $0x1b0] sm:$0xff]
        %v316 = vld [vmem:[%s251 + $0x1b8] sm:$0xff]
        %v317 = vld [vmem:[%s251 + $0x1c0] sm:$0xff]
        %v318 = vld [vmem:[%s251 + $0x1c8] sm:$0xff]
        %v319 = vld [vmem:[%s251 + $0x1d0] sm:$0xff]
        %v320 = vld [vmem:[%s251 + $0x1d8] sm:$0xff]
        %v321 = vld [vmem:[%s251 + $0x1e0] sm:$0xff]
        %v322 = vld [vmem:[%s251 + $0x1e8] sm:$0xff]
        %v323 = vld [vmem:[%s251 + $0x1f0] sm:$0xff]
        %v324 = vld [vmem:[%s251 + $0x1f8] sm:$0xff]
        %s325 = sld [smem:[#allocation2]]
        %v326 = vstv %s325
        %327 = vmatprep.subr.mxu0 0.0
        %328 = vmatpush1.msra.mxu0 %v261
        %329 = vmatprep.subr.mxu0 0.0
        %330 = vmatpush1.msra.mxu0 %v262
        %331 = vmatprep.subr.mxu0 0.0
        %332 = vmatpush1.msra.mxu0 %v263
        %333 = vmatprep.subr.mxu0 0.0
        %334 = vmatpush1.msra.mxu0 %v264
        %335 = vmatprep.subr.mxu0 0.0
        %336 = vmatpush1.msra.mxu0 %v265
        %337 = vmatprep.subr.mxu0 0.0
        %338 = vmatpush1.msra.mxu0 %v266
        %339 = vmatprep.subr.mxu0 0.0
        %340 = vmatpush1.msra.mxu0 %v267
        %341 = vmatprep.subr.mxu0 0.0
        %342 = vmatpush1.msra.mxu0 %v268
        %343 = vmatprep.subr.mxu0 0.0
        %344 = vmatpush1.msra.mxu0 %v269
        %345 = vmatprep.subr.mxu0 0.0
        %346 = vmatpush1.msra.mxu0 %v270
        %347 = vmatprep.subr.mxu0 0.0
        %348 = vmatpush1.msra.mxu0 %v271
        %349 = vmatprep.subr.mxu0 0.0
        %350 = vmatpush1.msra.mxu0 %v272
        %351 = vmatprep.subr.mxu0 0.0
        %352 = vmatpush1.msra.mxu0 %v273
        %353 = vmatprep.subr.mxu0 0.0
        %354 = vmatpush1.msra.mxu0 %v274
        %355 = vmatprep.subr.mxu0 0.0
        %356 = vmatpush1.msra.mxu0 %v275
        %357 = vmatprep.subr.mxu0 0.0
        %358 = vmatpush1.msra.mxu0 %v276
        %359 = vmatprep.subr.mxu0 0.0
        %360 = vmatpush1.msra.mxu0 %v277
        %361 = vmatprep.subr.mxu0 0.0
        %362 = vmatpush1.msra.mxu0 %v278
        %363 = vmatprep.subr.mxu0 0.0
        %364 = vmatpush1.msra.mxu0 %v279
        %365 = vmatprep.subr.mxu0 0.0
        %366 = vmatpush1.msra.mxu0 %v280
        %367 = vmatprep.subr.mxu0 0.0
        %368 = vmatpush1.msra.mxu0 %v281
        %369 = vmatprep.subr.mxu0 0.0
        %370 = vmatpush1.msra.mxu0 %v282
        %371 = vmatprep.subr.mxu0 0.0
        %372 = vmatpush1.msra.mxu0 %v283
        %373 = vmatprep.subr.mxu0 0.0
        %374 = vmatpush1.msra.mxu0 %v284
        %375 = vmatprep.subr.mxu0 0.0
        %376 = vmatpush1.msra.mxu0 %v285
        %377 = vmatprep.subr.mxu0 0.0
        %378 = vmatpush1.msra.mxu0 %v286
        %379 = vmatprep.subr.mxu0 0.0
        %380 = vmatpush1.msra.mxu0 %v287
        %381 = vmatprep.subr.mxu0 0.0
        %382 = vmatpush1.msra.mxu0 %v288
        %383 = vmatprep.subr.mxu0 0.0
        %384 = vmatpush1.msra.mxu0 %v289
        %385 = vmatprep.subr.mxu0 0.0
        %386 = vmatpush1.msra.mxu0 %v290
        %387 = vmatprep.subr.mxu0 0.0
        %388 = vmatpush1.msra.mxu0 %v291
        %389 = vmatprep.subr.mxu0 0.0
        %390 = vmatpush1.msra.mxu0 %v292
        %391 = vmatprep.mubr.f32.mxu0 %v254
        %392 = vmatmul.mubr.f32.gmra.mrb[0].mxu0 %v253
        %v393 = vpop.f32.mrb[0].mxu0
        %v394 = vadd.f32 %v326, %v393
        %v395 = vpop.f32.mrb[0].mxu0
        %396 = vmatprep.mubr.f32.mxu0 %v258
        %397 = vmatmul.mubr.f32.gmra.mrb[0].mxu0 %v257
        %v398 = vpop.f32.mrb[0].mxu0
        %v399 = vadd.f32 %v326, %v398
        %v400 = vpop.f32.mrb[0].mxu0
        %401 = vdwg.mxu0
        %402 = vmatprep.subr.mxu0 0.0
        %403 = vmatpush1.msra.mxu0 %v293
        %404 = vmatprep.subr.mxu0 0.0
        %405 = vmatpush1.msra.mxu0 %v294
        %406 = vmatprep.subr.mxu0 0.0
        %407 = vmatpush1.msra.mxu0 %v295
        %408 = vmatprep.subr.mxu0 0.0
        %409 = vmatpush1.msra.mxu0 %v296
        %410 = vmatprep.subr.mxu0 0.0
        %411 = vmatpush1.msra.mxu0 %v297
        %412 = vmatprep.subr.mxu0 0.0
        %413 = vmatpush1.msra.mxu0 %v298
        %414 = vmatprep.subr.mxu0 0.0
        %415 = vmatpush1.msra.mxu0 %v299
        %416 = vmatprep.subr.mxu0 0.0
        %417 = vmatpush1.msra.mxu0 %v300
        %418 = vmatprep.subr.mxu0 0.0
        %419 = vmatpush1.msra.mxu0 %v301
        %420 = vmatprep.subr.mxu0 0.0
        %421 = vmatpush1.msra.mxu0 %v302
        %422 = vmatprep.subr.mxu0 0.0
        %423 = vmatpush1.msra.mxu0 %v303
        %424 = vmatprep.subr.mxu0 0.0
        %425 = vmatpush1.msra.mxu0 %v304
        %426 = vmatprep.subr.mxu0 0.0
        %427 = vmatpush1.msra.mxu0 %v305
        %428 = vmatprep.subr.mxu0 0.0
        %429 = vmatpush1.msra.mxu0 %v306
        %430 = vmatprep.subr.mxu0 0.0
        %431 = vmatpush1.msra.mxu0 %v307
        %432 = vmatprep.subr.mxu0 0.0
        %433 = vmatpush1.msra.mxu0 %v308
        %434 = vmatprep.subr.mxu0 0.0
        %435 = vmatpush1.msra.mxu0 %v309
        %436 = vmatprep.subr.mxu0 0.0
        %437 = vmatpush1.msra.mxu0 %v310
        %438 = vmatprep.subr.mxu0 0.0
        %439 = vmatpush1.msra.mxu0 %v311
        %440 = vmatprep.subr.mxu0 0.0
        %441 = vmatpush1.msra.mxu0 %v312
        %442 = vmatprep.subr.mxu0 0.0
        %443 = vmatpush1.msra.mxu0 %v313
        %444 = vmatprep.subr.mxu0 0.0
        %445 = vmatpush1.msra.mxu0 %v314
        %446 = vmatprep.subr.mxu0 0.0
        %447 = vmatpush1.msra.mxu0 %v315
        %448 = vmatprep.subr.mxu0 0.0
        %449 = vmatpush1.msra.mxu0 %v316
        %450 = vmatprep.subr.mxu0 0.0
        %451 = vmatpush1.msra.mxu0 %v317
        %452 = vmatprep.subr.mxu0 0.0
        %453 = vmatpush1.msra.mxu0 %v318
        %454 = vmatprep.subr.mxu0 0.0
        %455 = vmatpush1.msra.mxu0 %v319
        %456 = vmatprep.subr.mxu0 0.0
        %457 = vmatpush1.msra.mxu0 %v320
        %458 = vmatprep.subr.mxu0 0.0
        %459 = vmatpush1.msra.mxu0 %v321
        %460 = vmatprep.subr.mxu0 0.0
        %461 = vmatpush1.msra.mxu0 %v322
        %462 = vmatprep.subr.mxu0 0.0
        %463 = vmatpush1.msra.mxu0 %v323
        %464 = vmatprep.subr.mxu0 0.0
        %465 = vmatpush1.msra.mxu0 %v324
        %466 = vmatprep.mubr.f32.mxu0 %v256
        %467 = vmatmul.mubr.f32.gmra.mrb[0].mxu0 %v255
        %v468 = vpop.f32.mrb[0].mxu0
        %v469 = vadd.f32 %v394, %v468
        %v470 = vpop.f32.mrb[0].mxu0
        %471 = vmatprep.mubr.f32.mxu0 %v260
        %472 = vmatmul.mubr.f32.gmra.mrb[0].mxu0 %v259
        %v473 = vpop.f32.mrb[0].mxu0
        %v474 = vadd.f32 %v399, %v473
        %v475 = vpop.f32.mrb[0].mxu0
        %476 = vdwg.mxu0
        %v477 = vld [vmem:[%s4] sm:$0xf]
        %v478 = vld [vmem:[%s4 + $0x4] sm:$0xf]
        %v479 = vld [vmem:[%s4 + $0x8] sm:$0xf]
        %v480 = vld [vmem:[%s4 + $0xc] sm:$0xf]
        %v481 = vld [vmem:[%s4 + $0x10] sm:$0xf]
        %v482 = vld [vmem:[%s4 + $0x14] sm:$0xf]
        %v483 = vld [vmem:[%s4 + $0x18] sm:$0xf]
        %v484 = vld [vmem:[%s4 + $0x1c] sm:$0xf]
        %v485 = vpack.c.bf16 %v474, %v469
        %v494 = vunpack.c.l.b16 %v477
        %v495 = vunpack.c.l.b16 %v478
        %v496 = vunpack.c.l.b16 %v479
        %v497 = vunpack.c.l.b16 %v480
        %v498 = vunpack.c.l.b16 %v481
        %v499 = vunpack.c.l.b16 %v482
        %v500 = vunpack.c.l.b16 %v483
        %v501 = vunpack.c.l.b16 %v484
        %v502 = vpack.c.b16 %v495, %v494
        %v503 = vpack.c.b16 %v497, %v496
        %v504 = vpack.c.b16 %v499, %v498
        %v505 = vpack.c.b16 %v501, %v500
        %vm506 = vcmask 130048
        %v508 = vsel %vm506, %v502, 0
        %v511 = vsel %vm506, %v503, 0
        %v514 = vsel %vm506, %v504, 0
        %v517 = vsel %vm506, %v505, 0
        %519 = vmatprep.subr.bf16.mxu0 0
        %520 = vmatpush1.bf16.msra.mxu0 %v485
        %521 = vmatprep.subr.bf16.mxu0 0
        %522 = vmatpush1.bf16.msra.mxu0 0
        %523 = vmatprep.subr.bf16.mxu0 0
        %524 = vmatpush1.bf16.msra.mxu0 0
        %525 = vmatprep.subr.bf16.mxu0 0
        %526 = vmatpush1.bf16.msra.mxu0 0
        %527 = vmatprep.subr.bf16.mxu0 0
        %528 = vmatpush1.bf16.msra.mxu0 0
        %529 = vmatprep.subr.bf16.mxu0 0
        %530 = vmatpush1.bf16.msra.mxu0 0
        %531 = vmatprep.subr.bf16.mxu0 0
        %532 = vmatpush1.bf16.msra.mxu0 0
        %533 = vmatprep.subr.bf16.mxu0 0
        %534 = vmatpush1.bf16.msra.mxu0 0
        %535 = vmatprep.subr.bf16.mxu0 0
        %536 = vmatpush1.bf16.msra.mxu0 0
        %537 = vmatprep.subr.bf16.mxu0 0
        %538 = vmatpush1.bf16.msra.mxu0 0
        %539 = vmatprep.subr.bf16.mxu0 0
        %540 = vmatpush1.bf16.msra.mxu0 0
        %541 = vmatprep.subr.bf16.mxu0 0
        %542 = vmatpush1.bf16.msra.mxu0 0
        %543 = vmatprep.subr.bf16.mxu0 0
        %544 = vmatpush1.bf16.msra.mxu0 0
        %545 = vmatprep.subr.bf16.mxu0 0
        %546 = vmatpush1.bf16.msra.mxu0 0
        %547 = vmatprep.subr.bf16.mxu0 0
        %548 = vmatpush1.bf16.msra.mxu0 0
        %549 = vmatprep.subr.bf16.mxu0 0
        %550 = vmatpush1.bf16.msra.mxu0 0
        %551 = vmatprep.mubr.bf16.mxu0 0
        %552 = vmatmul.mubr.bf16.gmra.mrb[0].mxu0 %v508
        %v553 = vpop.f32.mrb[0].mxu0
        %v554 = vadd.f32 0.0, %v553
        %v555 = vpop.f32.mrb[0].mxu0
        %v556 = vpop.f32.mrb[0].mxu0
        %v557 = vadd.f32 0.0, %v556
        %v558 = vpop.f32.mrb[0].mxu0
        %559 = vmatprep.mubr.bf16.mxu0 0
        %560 = vmatmul.mubr.bf16.gmra.mrb[0].mxu0 %v511
        %v561 = vpop.f32.mrb[0].mxu0
        %v562 = vadd.f32 0.0, %v561
        %v563 = vpop.f32.mrb[0].mxu0
        %v564 = vpop.f32.mrb[0].mxu0
        %v565 = vadd.f32 0.0, %v564
        %v566 = vpop.f32.mrb[0].mxu0
        %567 = vmatprep.mubr.bf16.mxu0 0
        %568 = vmatmul.mubr.bf16.gmra.mrb[0].mxu0 %v514
        %v569 = vpop.f32.mrb[0].mxu0
        %v570 = vadd.f32 0.0, %v569
        %v571 = vpop.f32.mrb[0].mxu0
        %v572 = vpop.f32.mrb[0].mxu0
        %v573 = vadd.f32 0.0, %v572
        %v574 = vpop.f32.mrb[0].mxu0
        %575 = vmatprep.mubr.bf16.mxu0 0
        %576 = vmatmul.mubr.bf16.gmra.mrb[0].mxu0 %v517
        %v577 = vpop.f32.mrb[0].mxu0
        %v578 = vadd.f32 0.0, %v577
        %v579 = vpop.f32.mrb[0].mxu0
        %v580 = vpop.f32.mrb[0].mxu0
        %v581 = vadd.f32 0.0, %v580
        %v582 = vpop.f32.mrb[0].mxu0
        %583 = vdwg.mxu0
        %v584 = vpack.c.bf16 %v557, %v554
        %v585 = vpack.c.bf16 %v565, %v562
        %v586 = vpack.c.bf16 %v573, %v570
        %v587 = vpack.c.bf16 %v581, %v578
        %v588 = vld [vmem:[%s5] sm:$0xf]
        %v589 = vld [vmem:[%s5 + $0x4] sm:$0xf]
        %v592 = vunpack.c.l.b16 %v588
        %v593 = vunpack.c.l.b16 %v589
        %v594 = vpack.c.b16 %v593, %v592
        %v597 = vsel %vm506, %v584, 0
        %v600 = vsel %vm506, %v585, 0
        %v603 = vsel %vm506, %v586, 0
        %v606 = vsel %vm506, %v587, 0
        %608 = vmatprep.subr.bf16.mxu0 0
        %609 = vmatpush1.bf16.msra.mxu0 %v594
        %610 = vmatprep.subr.bf16.mxu0 0
        %611 = vmatpush1.bf16.msra.mxu0 0
        %612 = vmatprep.subr.bf16.mxu0 0
        %613 = vmatpush1.bf16.msra.mxu0 0
        %614 = vmatprep.subr.bf16.mxu0 0
        %615 = vmatpush1.bf16.msra.mxu0 0
        %616 = vmatprep.subr.bf16.mxu0 0
        %617 = vmatpush1.bf16.msra.mxu0 0
        %618 = vmatprep.subr.bf16.mxu0 0
        %619 = vmatpush1.bf16.msra.mxu0 0
        %620 = vmatprep.subr.bf16.mxu0 0
        %621 = vmatpush1.bf16.msra.mxu0 0
        %622 = vmatprep.subr.bf16.mxu0 0
        %623 = vmatpush1.bf16.msra.mxu0 0
        %624 = vmatprep.subr.bf16.mxu0 0
        %625 = vmatpush1.bf16.msra.mxu0 0
        %626 = vmatprep.subr.bf16.mxu0 0
        %627 = vmatpush1.bf16.msra.mxu0 0
        %628 = vmatprep.subr.bf16.mxu0 0
        %629 = vmatpush1.bf16.msra.mxu0 0
        %630 = vmatprep.subr.bf16.mxu0 0
        %631 = vmatpush1.bf16.msra.mxu0 0
        %632 = vmatprep.subr.bf16.mxu0 0
        %633 = vmatpush1.bf16.msra.mxu0 0
        %634 = vmatprep.subr.bf16.mxu0 0
        %635 = vmatpush1.bf16.msra.mxu0 0
        %636 = vmatprep.subr.bf16.mxu0 0
        %637 = vmatpush1.bf16.msra.mxu0 0
        %638 = vmatprep.subr.bf16.mxu0 0
        %639 = vmatpush1.bf16.msra.mxu0 0
        %640 = vmatprep.mubr.bf16.mxu0 0
        %641 = vmatmul.mubr.bf16.gmra.mrb[0].mxu0 %v597
        %v642 = vpop.f32.mrb[0].mxu0
        %v643 = vadd.f32 0.0, %v642
        %v644 = vpop.f32.mrb[0].mxu0
        %v645 = vpop.f32.mrb[0].mxu0
        %v646 = vadd.f32 0.0, %v645
        %v647 = vpop.f32.mrb[0].mxu0
        %648 = vmatprep.mubr.bf16.mxu0 0
        %649 = vmatmul.mubr.bf16.gmra.mrb[0].mxu0 %v600
        %v650 = vpop.f32.mrb[0].mxu0
        %v651 = vadd.f32 0.0, %v650
        %v652 = vpop.f32.mrb[0].mxu0
        %v653 = vpop.f32.mrb[0].mxu0
        %v654 = vadd.f32 0.0, %v653
        %v655 = vpop.f32.mrb[0].mxu0
        %656 = vmatprep.mubr.bf16.mxu0 0
        %657 = vmatmul.mubr.bf16.gmra.mrb[0].mxu0 %v603
        %v658 = vpop.f32.mrb[0].mxu0
        %v659 = vadd.f32 0.0, %v658
        %v660 = vpop.f32.mrb[0].mxu0
        %v661 = vpop.f32.mrb[0].mxu0
        %v662 = vadd.f32 0.0, %v661
        %v663 = vpop.f32.mrb[0].mxu0
        %664 = vmatprep.mubr.bf16.mxu0 0
        %665 = vmatmul.mubr.bf16.gmra.mrb[0].mxu0 %v606
        %v666 = vpop.f32.mrb[0].mxu0
        %v667 = vadd.f32 0.0, %v666
        %v668 = vpop.f32.mrb[0].mxu0
        %v669 = vpop.f32.mrb[0].mxu0
        %v670 = vadd.f32 0.0, %v669
        %v671 = vpop.f32.mrb[0].mxu0
        %672 = vdwg.mxu0
        %v673 = vsub.f32 0.0, %v643
        %v674 = vsub.f32 0.0, %v646
        %v675 = vsub.f32 0.0, %v651
        %v676 = vsub.f32 0.0, %v654
        %v677 = vsub.f32 0.0, %v659
        %v678 = vsub.f32 0.0, %v662
        %v679 = vsub.f32 0.0, %v667
        %v680 = vsub.f32 0.0, %v670
        %v681 = vmul.f32 %v673, 1.442695
        %v682 = vpow.pop %v681
        %v683 = vmul.f32 %v674, 1.442695
        %v684 = vpow.pop %v683
        %v685 = vmul.f32 %v675, 1.442695
        %v686 = vpow.pop %v685
        %v687 = vmul.f32 %v676, 1.442695
        %v688 = vpow.pop %v687
        %v689 = vmul.f32 %v677, 1.442695
        %v690 = vpow.pop %v689
        %v691 = vmul.f32 %v678, 1.442695
        %v692 = vpow.pop %v691
        %v693 = vmul.f32 %v679, 1.442695
        %v694 = vpow.pop %v693
        %v695 = vmul.f32 %v680, 1.442695
        %v696 = vpow.pop %v695
        %v697 = vadd.f32 %v682, 1.0
        %v698 = vadd.f32 %v684, 1.0
        %v699 = vadd.f32 %v686, 1.0
        %v700 = vadd.f32 %v688, 1.0
        %v701 = vadd.f32 %v690, 1.0
        %v702 = vadd.f32 %v692, 1.0
        %v703 = vadd.f32 %v694, 1.0
        %v704 = vadd.f32 %v696, 1.0
        %v705 = vrcp.pop %v697
        %v706 = vrcp.pop %v698
        %v707 = vrcp.pop %v699
        %v708 = vrcp.pop %v700
        %v709 = vrcp.pop %v701
        %v710 = vrcp.pop %v702
        %v711 = vrcp.pop %v703
        %v712 = vrcp.pop %v704
        %s713 = sld [smem:[#allocation3]]
        %v714 = vstv %s713
        %v715 = vmul.f32 %v705, %v714
        %v716 = vmul.f32 %v706, %v714
        %v717 = vmul.f32 %v707, %v714
        %v718 = vmul.f32 %v708, %v714
        %v719 = vmul.f32 %v709, %v714
        %v720 = vmul.f32 %v710, %v714
        %v721 = vmul.f32 %v711, %v714
        %v722 = vmul.f32 %v712, %v714
        %vm723 = vcmask 523264
        %724 = vst.msk [vmem:[%s246] sm:$0xff] %vm723, %v715
        %725 = vst.msk [vmem:[%s246 + $0x8] sm:$0xff] %vm723, %v716
        %726 = vst.msk [vmem:[%s246 + $0x10] sm:$0xff] %vm723, %v717
        %727 = vst.msk [vmem:[%s246 + $0x18] sm:$0xff] %vm723, %v718
        %728 = vst.msk [vmem:[%s246 + $0x20] sm:$0xff] %vm723, %v719
        %729 = vst.msk [vmem:[%s246 + $0x28] sm:$0xff] %vm723, %v720
        %730 = vst.msk [vmem:[%s246 + $0x30] sm:$0xff] %vm723, %v721
        %731 = vst.msk [vmem:[%s246 + $0x38] sm:$0xff] %vm723, %v722
        %s732 = sand.u32 %s161, 1
        %s733 = scalar_lea.sflag [#allocation5], %s732
        %s734 = sand.u32 %s161, 1
        %s735 = smul.addr %s734, 64
        %s736 = scalar_lea.vmem [#allocation4], %s735
        // Predicated region
        $region45: #{tpu_custom_call.1} parent=43 // pred_check
          %p737 = pneg %p171
        $region46: #{tpu_custom_call.1} parent=43 // pred_check_branch
          %739 = sbr.rel (%p737) target = $region48
        $region47: #{tpu_custom_call.1} parent=43 // pred_region
          %s741 = ssub.s32 1024, 1024
          %742 = vsyncadd %s733, %s741
          %s743 = smul.addr %s22, 8
          %s744 = smul.addr %s743, 128
          %s745 = scalar_lea.hbm %s6, %s744
          %s746 = sshll.u32 %s736, 4
          %s747 = int_to_ptr.vmem [resolvable:$true] %s746
          %752 = dma.vmem_to_hbm [thread:$0]  %s747, 1024, %s745, %s733, 128, 128, 8
        $region48: #{tpu_custom_call.1} parent=43 // pred_fallthru
          _
      $region44: #{tpu_custom_call.1} parent=5 // pred_fallthru
        _
      %p753 = scmp.le.s32.totalorder 2, %s17
      // Predicated region
      $region49: #{tpu_custom_call.1} parent=5 // pred_check
        %p754 = pneg %p753
      $region50: #{tpu_custom_call.1} parent=5 // pred_check_branch
        %756 = sbr.rel (%p754) target = $region52
      $region51: #{tpu_custom_call.1} parent=5 // pred_region
        %s757 = ssub.s32 %s17, 2
        // Predicated region
        $region53: #{tpu_custom_call.1} parent=51 // pred_check
          %p758 = pneg %p177
        $region54: #{tpu_custom_call.1} parent=51 // pred_check_branch
          %760 = sbr.rel (%p758) target = $region56
        $region55: #{tpu_custom_call.1} parent=51 // pred_region
          %s761 = sand.u32 %s162, 1
          %s762 = scalar_lea.sflag [#allocation5], %s761
          %s763 = sand.u32 %s162, 1
          %s764 = smul.addr %s763, 64
          %s765 = scalar_lea.vmem [#allocation4], %s764
          %766 = dma.done %s762, 1024
        $region56: #{tpu_custom_call.1} parent=51 // pred_fallthru
          _
      $region52: #{tpu_custom_call.1} parent=5 // pred_fallthru
        _
    $region6: #{tpu_custom_call.1} parent=1 // loop_footer
      %s21 = sadd.s32 1, %s17
    $region7: #{tpu_custom_call.1} parent=1 // loop_footer_branch
      %16 = sbr.rel target = $region3
    $region8: #{tpu_custom_call.1} parent=1 // loop_exit
      _
    %767 = vsyncpa [#allocation5], 1
    %s768 = scalar_lea.sflag [#allocation5], 1
    %769 = vsyncpa %s768, 1

</llo_original>
